<compile_context>
chip_gen: v5e
topology: v5e:2x2
jax: 0.10.0
libtpu: 0.0.40
codegen_flags: <defaults>
</compile_context>

<pallas_src>
import jax
import jax.numpy as jnp
from jax.experimental import pallas as pl
from jax.experimental.pallas import tpu as pltpu


def mha_kernel(h_ref, w_ref, b_ref, out_ref):
    N, tbn, Din = h_ref.shape
    Wtot = w_ref.shape[1]          # 2 * Dp
    Dp = Wtot // 2
    M = N * tbn

    # Single fused projection: bf16 operands, f32 accumulation on the MXU.
    h2 = h_ref[...].reshape(M, Din)
    y = jnp.dot(h2, w_ref[...], preferred_element_type=jnp.float32)
    y = y + b_ref[...]                           # bias kept in f32
    y = y.reshape(N, tbn, Wtot)

    # 128-aligned lane slices -> no relayout.
    f = y[:, :, :Dp]                             # feat (pad lanes are 0)
    g = y[:, :, Dp:]                             # gate logits, pre-expanded per lane

    # Numerically-stable softmax over N (dim=0 in PyTorch), independent per lane.
    # Lanes belonging to the same head carry identical logits, so this equals
    # the per-head softmax broadcast across the head's dh lanes.
    g_max = jnp.max(g, axis=0, keepdims=True)
    g_exp = jnp.exp(g - g_max)
    denom = jnp.sum(g_exp, axis=0, keepdims=True)
    g_sm = g_exp / denom                         # exact; denominator is tiny
    # TODO(synk): attn_drop (nn.Dropout(0.1)) treated as identity (eval mode).

    # Gated weighted sum over N, lane-dense store.
    out_ref[...] = jnp.sum(g_sm * f, axis=0).astype(out_ref.dtype)


def _round_up(x, m):
    return (x + m - 1) // m * m


def _default_vmem_limit():
    """Generation-aware VMEM request: ~96 MiB on 128 MiB parts (v5e/v6e),
    ~40 MiB on the 64 MiB part (v7x)."""
    try:
        cap = int(getattr(pltpu.get_tpu_info(), "vmem_capacity_bytes",
                          64 * 1024 * 1024))
    except Exception:
        cap = 64 * 1024 * 1024
    return max(16 * 1024 * 1024,
               min(cap - 24 * 1024 * 1024, (3 * cap) // 4))


def _choose_tbn(N, BN, D, Dp, vmem_limit_bytes):
    """Largest BN tile that fits the VMEM budget, preferring >= 4 grid steps
    (2 pipelined steps per TensorCore on dual-TC v7x)."""
    SUB = 16                                        # bf16 sublane packing
    budget = int(vmem_limit_bytes * 0.55)           # headroom for scratch/spills
    Wtot = 2 * Dp
    # Double-buffered bf16 fused weights + f32 bias (constant index_map, but
    # the default pipeline still reserves 2 buffers).
    fixed = 2 * (D * Wtot * 2 + Wtot * 4)

    def est(t):
        m = N * t
        h_tile = 2 * N * t * D * 2                  # double-buffered bf16 h block
        out_tile = 2 * t * Dp * 4                   # double-buffered f32 out block
        # y + f/g views + exp/softmax temporaries + product + accumulator (f32)
        interm = m * Wtot * 4 + 4 * m * Dp * 4 + t * Dp * 4
        return fixed + h_tile + out_tile + interm

    cands = sorted({t for t in range(SUB, BN + 1, SUB) if BN % t == 0} | {BN})
    fitting = [t for t in cands if est(t) <= budget] or [cands[0]]
    for min_steps in (4, 2):
        pref = [t for t in fitting if BN // t >= min_steps]
        if pref:
            return max(pref)
    return max(fitting)


def multi_head_attention(h, wf, bf, wg, bg, *, heads, tbn=None,
                         vmem_limit_bytes=None):
    """h: (N, BN, D); wf: (D, D), bf: (D,), wg: (D, heads), bg: (heads,);
    weights stored (in, out) so y = x @ W + b.  Returns (BN, D)."""
    N, BN, D = h.shape
    assert D % heads == 0, "hidden must be divisible by heads"
    dh = D // heads

    LANE = 128
    Dp = _round_up(D, LANE)
    out_dtype = h.dtype

    if vmem_limit_bytes is None:
        vmem_limit_bytes = _default_vmem_limit()

    # Fold the head->lane expansion into the gate weights (softmax over N
    # commutes with duplicating a head's column across its dh lanes).
    lane_head = jnp.arange(D) // dh                     # (D,)
    wg_exp = wg[:, lane_head]                           # (D, D)
    bg_exp = bg[lane_head]                              # (D,)

    # Fused, lane-padded feat+gate weight / bias (pad columns are zero).
    wf_p = jnp.pad(wf, ((0, 0), (0, Dp - D)))
    wg_p = jnp.pad(wg_exp, ((0, 0), (0, Dp - D)))
    w_cat = jnp.concatenate([wf_p, wg_p], axis=1).astype(jnp.bfloat16)  # (D, 2*Dp)
    b_cat = jnp.concatenate([jnp.pad(bf, (0, Dp - D)),
                             jnp.pad(bg_exp, (0, Dp - D))]
                            ).reshape(1, 2 * Dp).astype(jnp.float32)    # (1, 2*Dp)

    h_bf = h.astype(jnp.bfloat16)

    if tbn is None:
        tbn = _choose_tbn(N, BN, D, Dp, vmem_limit_bytes)
    assert BN % tbn == 0 and (tbn % 8 == 0 or tbn == BN)

    out_padded = pl.pallas_call(
        mha_kernel,
        out_shape=jax.ShapeDtypeStruct((BN, Dp), out_dtype),
        grid_spec=pltpu.PrefetchScalarGridSpec(
            num_scalar_prefetch=0,
            grid=(BN // tbn,),
            in_specs=[
                pl.BlockSpec((N, tbn, D), lambda i: (0, i, 0)),   # h tile over BN
                pl.BlockSpec((D, 2 * Dp), lambda i: (0, 0)),      # fused bf16 weights
                pl.BlockSpec((1, 2 * Dp), lambda i: (0, 0)),      # fused f32 bias
            ],
            out_specs=pl.BlockSpec((tbn, Dp), lambda i: (i, 0)),  # lane-dense output slab
        ),
        compiler_params=pltpu.CompilerParams(
            dimension_semantics=("parallel",),
            vmem_limit_bytes=vmem_limit_bytes),
    )(h_bf, w_cat, b_cat)

    return out_padded[:, :D] if Dp != D else out_padded


def reference(h, wf, bf, wg, bg, heads):
    N, BN, D = h.shape
    dh = D // heads
    f = (h @ wf + bf).reshape(N, BN, heads, dh)
    g = (h @ wg + bg).reshape(N, BN, heads, 1)
    g_sm = jax.nn.softmax(g, axis=0)
    return jnp.sum(g_sm * f, axis=0).reshape(BN, D)


if __name__ == "__main__":
    N, BN, hidden, heads = 8, 16, 32, 4

    key = jax.random.PRNGKey(0)
    k1, k2, k3, k4, k5 = jax.random.split(key, 5)
    h = jax.random.normal(k1, (N, BN, hidden), jnp.float32)
    # Deterministic synthetic parameters (feat: Linear(hidden, hidden),
    # gate: Linear(hidden, heads)); stored as (in, out).
    wf = jax.random.normal(k2, (hidden, hidden), jnp.float32) * 0.1
    bf = jax.random.normal(k3, (hidden,), jnp.float32) * 0.1
    wg = jax.random.normal(k4, (hidden, heads), jnp.float32) * 0.1
    bg = jax.random.normal(k5, (heads,), jnp.float32) * 0.1

    out = multi_head_attention(h, wf, bf, wg, bg, heads=heads)
    out = jax.block_until_ready(out)

    ref = reference(h, wf, bf, wg, bg, heads)
    assert out.shape == (BN, hidden)
    max_err = float(jnp.max(jnp.abs(out - ref)))
    # bf16 MXU operands (vs. the f32 reference) -> relaxed tolerance.
    assert jnp.allclose(out, ref, atol=2e-2, rtol=2e-2), max_err
    print("KERNEL_OK")
</pallas_src>

<mosaic_0001>
module attributes {stable_mosaic.version = 11 : i64} {
  func.func @mha_kernel(%arg0: i32, %arg1: memref<8x16x32xbf16, #tpu.memory_space<vmem>>, %arg2: memref<32x256xbf16, #tpu.memory_space<vmem>>, %arg3: memref<1x256xf32, #tpu.memory_space<vmem>>, %arg4: memref<16x128xf32, #tpu.memory_space<vmem>>) attributes {dimension_semantics = [#tpu.dimension_semantics<parallel>], iteration_bounds = array<i64: 1>, scalar_prefetch = 0 : i64, scratch_operands = 0 : i64, tpu.core_type = #tpu.core_type<tc>, window_params = [{transform_indices = @transform_0, window_bounds = array<i64: 8, 16, 32>}, {pipeline_mode = #tpu.pipeline_mode<synchronous>, transform_indices = @transform_1, window_bounds = array<i64: 32, 256>}, {pipeline_mode = #tpu.pipeline_mode<synchronous>, transform_indices = @transform_2, window_bounds = array<i64: 1, 256>}, {transform_indices = @transform_3, window_bounds = array<i64: 16, 128>}]} {
    %c0 = arith.constant 0 : index
    %c0_0 = arith.constant 0 : index
    %c0_1 = arith.constant 0 : index
    %0 = vector.load %arg1[%c0, %c0_0, %c0_1] : memref<8x16x32xbf16, #tpu.memory_space<vmem>>, vector<8x16x32xbf16>
    %1 = vector.shape_cast %0 : vector<8x16x32xbf16> to vector<128x32xbf16>
    %c0_2 = arith.constant 0 : index
    %c0_3 = arith.constant 0 : index
    %2 = vector.load %arg2[%c0_2, %c0_3] : memref<32x256xbf16, #tpu.memory_space<vmem>>, vector<32x256xbf16>
    %cst = arith.constant dense<0.000000e+00> : vector<128x256xf32>
    %3 = tpu.matmul %1, %2, %cst {dimension_numbers = #tpu.dot_dimension_numbers<[1], [0], [0], [1], [0, 0, 1, 1], [], []>} : vector<128x32xbf16>, vector<32x256xbf16>, vector<128x256xf32> -> vector<128x256xf32>
    %c0_4 = arith.constant 0 : index
    %c0_5 = arith.constant 0 : index
    %4 = vector.load %arg3[%c0_4, %c0_5] : memref<1x256xf32, #tpu.memory_space<vmem>>, vector<1x256xf32>
    %5 = vector.broadcast %4 : vector<1x256xf32> to vector<128x256xf32>
    %6 = arith.addf %3, %5 : vector<128x256xf32>
    %7 = vector.shape_cast %6 : vector<128x256xf32> to vector<8x16x256xf32>
    %8 = vector.extract_strided_slice %7 {offsets = [0, 0, 0], sizes = [8, 16, 128], strides = [1, 1, 1]} : vector<8x16x256xf32> to vector<8x16x128xf32>
    %9 = vector.extract_strided_slice %7 {offsets = [0, 0, 128], sizes = [8, 16, 128], strides = [1, 1, 1]} : vector<8x16x256xf32> to vector<8x16x128xf32>
    %cst_6 = arith.constant dense<0xFF800000> : vector<16x128xf32>
    %10 = vector.multi_reduction <maximumf>, %9, %cst_6 [0] : vector<8x16x128xf32> to vector<16x128xf32>
    %11 = vector.shape_cast %10 : vector<16x128xf32> to vector<1x16x128xf32>
    %12 = vector.broadcast %11 : vector<1x16x128xf32> to vector<8x16x128xf32>
    %13 = arith.subf %9, %12 : vector<8x16x128xf32>
    %14 = math.exp %13 : vector<8x16x128xf32>
    %cst_7 = arith.constant dense<0.000000e+00> : vector<16x128xf32>
    %15 = vector.multi_reduction <add>, %14, %cst_7 [0] : vector<8x16x128xf32> to vector<16x128xf32>
    %16 = vector.shape_cast %15 : vector<16x128xf32> to vector<1x16x128xf32>
    %17 = vector.broadcast %16 : vector<1x16x128xf32> to vector<8x16x128xf32>
    %18 = arith.divf %14, %17 : vector<8x16x128xf32>
    %19 = arith.mulf %18, %8 : vector<8x16x128xf32>
    %cst_8 = arith.constant dense<0.000000e+00> : vector<16x128xf32>
    %20 = vector.multi_reduction <add>, %19, %cst_8 [0] : vector<8x16x128xf32> to vector<16x128xf32>
    %c0_9 = arith.constant 0 : index
    %c0_10 = arith.constant 0 : index
    %21 = vector.load %arg4[%c0_9, %c0_10] : memref<16x128xf32, #tpu.memory_space<vmem>>, vector<16x128xf32>
    tpu.vector_store %arg4[%c0_9, %c0_10], %20 {strides = array<i32>} : memref<16x128xf32, #tpu.memory_space<vmem>>, vector<16x128xf32>,
    return
  }
  func.func @transform_0(%arg0: i32) -> (i32, i32, i32) {
    %c0_i32 = arith.constant 0 : i32
    %c0_i32_0 = arith.constant 0 : i32
    %c0_i32_1 = arith.constant 0 : i32
    return %c0_i32, %arg0, %c0_i32_0 : i32, i32, i32
  }
  func.func @transform_1(%arg0: i32) -> (i32, i32) {
    %c0_i32 = arith.constant 0 : i32
    %c0_i32_0 = arith.constant 0 : i32
    %c0_i32_1 = arith.constant 0 : i32
    return %c0_i32, %c0_i32_0 : i32, i32
  }
  func.func @transform_2(%arg0: i32) -> (i32, i32) {
    %c0_i32 = arith.constant 0 : i32
    %c0_i32_0 = arith.constant 0 : i32
    %c0_i32_1 = arith.constant 0 : i32
    return %c0_i32, %c0_i32_0 : i32, i32
  }
  func.func @transform_3(%arg0: i32) -> (i32, i32) {
    %c0_i32 = arith.constant 0 : i32
    %c0_i32_0 = arith.constant 0 : i32
    return %arg0, %c0_i32 : i32, i32
  }
}

</mosaic_0001>

<llo_original>
// kernel: tpu_custom_call.1
$region0: #{tpu_custom_call.1}
  #allocation0 [shape = 'u32[]', space=smem, size = 0x4, offset = 0x4, fixed_abs, tag = 'smem constant byte address 0x4 - core index']
  #allocation1 [shape = 'u32[72,128]{1,0:T(1,128)}', space=vmem, size = 0x9000, scoped, tag = 'internal scratch']
  %s0 = inlined_call_operand.hbm [shape: bf16[8,16,32], index: 0, kind: input, shape index: {}]
  %s1 = inlined_call_operand.hbm [shape: bf16[32,256], index: 1, kind: input, shape index: {}]
  %s2 = inlined_call_operand.hbm [shape: f32[1,256], index: 2, kind: input, shape index: {}]
  %s3 = inlined_call_operand.hbm [shape: f32[16,128], index: 3, kind: output, shape index: {}]
  %s4 = sld [smem:[#allocation0]]
  $region34: #{tpu_custom_call.1} parent=0
    _
  %s6 = ssub.s32 1, %s4
  %s7 = scalar_select 0, %s6, %s4
  $region1: #{tpu_custom_call.1} parent=0
    #allocation2 [shape = 'u8[32768]{0}', space=vmem, size = 0x8000, scoped, tag = 'input window, operand 0, single buffered']
    #allocation3 [shape = 's32[1]{0}', space=sflag, size = 0x4, scoped, tag = 'scoped memory for tpu_custom_call.1']
    #allocation4 [shape = 's32[1]{0}', space=sflag, size = 0x4, scoped, tag = 'scoped memory for tpu_custom_call.1']
    #allocation5 [shape = 'u8[16384]{0}', space=vmem, size = 0x4000, scoped, tag = 'input window, operand 1, single buffered']
    #allocation6 [shape = 's32[1]{0}', space=sflag, size = 0x4, scoped, tag = 'scoped memory for tpu_custom_call.1']
    #allocation7 [shape = 'u8[1024]{0}', space=vmem, size = 0x400, scoped, tag = 'input window, operand 2, single buffered']
    #allocation8 [shape = 'u8[8192]{0}', space=vmem, size = 0x2000, scoped, tag = 'output window, operand 0, single buffered']
    %8 = vsyncpa [#allocation3], 0
    %9 = vsyncpa [#allocation6], 0
    %10 = vsyncpa [#allocation4], 0
    // Predicated region
    $region2: #{tpu_custom_call.1} parent=1 // pred_check
      _
    $region3: #{tpu_custom_call.1} parent=1 // pred_check_branch
      %12 = sbr.rel (0) target = $region5
    $region4: #{tpu_custom_call.1} parent=1 // pred_region
      %14 = vsyncadd [#allocation3], 0
      %s15 = sshll.u32 %s0, 4
      %s16 = int_to_ptr.hbm [resolvable:$true] %s15
      %s17 = sshll.u32 [#allocation2], 4
      %s18 = int_to_ptr.vmem [resolvable:$true] %s17
      %23 = dma.hbm_to_vmem [thread:$0]  %s16, 1024, %s18, [#allocation3], 64, 64, 4
    $region5: #{tpu_custom_call.1} parent=1 // pred_fallthru
      _
    // Predicated region
    $region6: #{tpu_custom_call.1} parent=1 // pred_check
      _
    $region7: #{tpu_custom_call.1} parent=1 // pred_check_branch
      %25 = sbr.rel (0) target = $region9
    $region8: #{tpu_custom_call.1} parent=1 // pred_region
      %27 = vsyncadd [#allocation6], 0
      %s28 = sshll.u32 %s1, 4
      %s29 = int_to_ptr.hbm [resolvable:$true] %s28
      %s30 = sshll.u32 [#allocation5], 4
      %s31 = int_to_ptr.vmem [resolvable:$true] %s30
      %36 = dma.hbm_to_vmem [thread:$0]  %s29, 512, %s31, [#allocation6], 128, 128, 8
    $region9: #{tpu_custom_call.1} parent=1 // pred_fallthru
      _
    // Predicated region
    $region10: #{tpu_custom_call.1} parent=1 // pred_check
      _
    $region11: #{tpu_custom_call.1} parent=1 // pred_check_branch
      %38 = sbr.rel (0) target = $region13
    $region12: #{tpu_custom_call.1} parent=1 // pred_region
      %40 = vsyncadd [#allocation6], 0
      %s42 = sshll.u32 %s2, 4
      %s43 = int_to_ptr.hbm [resolvable:$true] %s42
      %s44 = sshll.u32 [#allocation7], 4
      %s45 = int_to_ptr.vmem [resolvable:$true] %s44
      %47 = dma.hbm_to_vmem [thread:$0]  %s43, 32, %s45, [#allocation6]
    $region13: #{tpu_custom_call.1} parent=1 // pred_fallthru
      _
    // Predicated region
    $region14: #{tpu_custom_call.1} parent=1 // pred_check
      _
    $region15: #{tpu_custom_call.1} parent=1 // pred_check_branch
      %49 = sbr.rel (0) target = $region17
    $region16: #{tpu_custom_call.1} parent=1 // pred_region
      %51 = dma.done [#allocation3], 1024
    $region17: #{tpu_custom_call.1} parent=1 // pred_fallthru
      _
    // Predicated region
    $region18: #{tpu_custom_call.1} parent=1 // pred_check
      _
    $region19: #{tpu_custom_call.1} parent=1 // pred_check_branch
      %53 = sbr.rel (0) target = $region21
    $region20: #{tpu_custom_call.1} parent=1 // pred_region
      %55 = dma.done [#allocation6], 512
    $region21: #{tpu_custom_call.1} parent=1 // pred_fallthru
      _
    // Predicated region
    $region22: #{tpu_custom_call.1} parent=1 // pred_check
      _
    $region23: #{tpu_custom_call.1} parent=1 // pred_check_branch
      %57 = sbr.rel (0) target = $region25
    $region24: #{tpu_custom_call.1} parent=1 // pred_region
      %59 = dma.done [#allocation6], 32
    $region25: #{tpu_custom_call.1} parent=1 // pred_fallthru
      _
    %v61 = vld [vmem:[#allocation2] sm:$0xf]
    %v62 = vld [vmem:[#allocation2 + $0x4] sm:$0xf]
    %v63 = vld [vmem:[#allocation2 + $0x8] sm:$0xf]
    %v64 = vld [vmem:[#allocation2 + $0xc] sm:$0xf]
    %v65 = vld [vmem:[#allocation2 + $0x10] sm:$0xf]
    %v66 = vld [vmem:[#allocation2 + $0x14] sm:$0xf]
    %v67 = vld [vmem:[#allocation2 + $0x18] sm:$0xf]
    %v68 = vld [vmem:[#allocation2 + $0x1c] sm:$0xf]
    %v69 = vld [vmem:[#allocation2 + $0x20] sm:$0xf]
    %v70 = vld [vmem:[#allocation2 + $0x24] sm:$0xf]
    %v71 = vld [vmem:[#allocation2 + $0x28] sm:$0xf]
    %v72 = vld [vmem:[#allocation2 + $0x2c] sm:$0xf]
    %v73 = vld [vmem:[#allocation2 + $0x30] sm:$0xf]
    %v74 = vld [vmem:[#allocation2 + $0x34] sm:$0xf]
    %v75 = vld [vmem:[#allocation2 + $0x38] sm:$0xf]
    %v76 = vld [vmem:[#allocation2 + $0x3c] sm:$0xf]
    %v77 = vld [vmem:[#allocation5] sm:$0xff]
    %v78 = vld [vmem:[#allocation5 + $0x8] sm:$0xff]
    %v79 = vld [vmem:[#allocation5 + $0x10] sm:$0xff]
    %v80 = vld [vmem:[#allocation5 + $0x18] sm:$0xff]
    %v81 = vld [vmem:[#allocation7] sm:$0x3]
    %v83 = vperm.slane %v81, 0
    %v84 = vperm.slane %v81, 1
    %v103 = vunpack.c.l.b16 %v61
    %v104 = vunpack.c.l.b16 %v62
    %v105 = vunpack.c.l.b16 %v63
    %v106 = vunpack.c.l.b16 %v64
    %v107 = vunpack.c.l.b16 %v65
    %v108 = vunpack.c.l.b16 %v66
    %v109 = vunpack.c.l.b16 %v67
    %v110 = vunpack.c.l.b16 %v68
    %v111 = vunpack.c.l.b16 %v69
    %v112 = vunpack.c.l.b16 %v70
    %v113 = vunpack.c.l.b16 %v71
    %v114 = vunpack.c.l.b16 %v72
    %v115 = vunpack.c.l.b16 %v73
    %v116 = vunpack.c.l.b16 %v74
    %v117 = vunpack.c.l.b16 %v75
    %v118 = vunpack.c.l.b16 %v76
    %v119 = vpack.c.b16 %v104, %v103
    %v120 = vpack.c.b16 %v106, %v105
    %v121 = vpack.c.b16 %v108, %v107
    %v122 = vpack.c.b16 %v110, %v109
    %v123 = vpack.c.b16 %v112, %v111
    %v124 = vpack.c.b16 %v114, %v113
    %v125 = vpack.c.b16 %v116, %v115
    %v126 = vpack.c.b16 %v118, %v117
    %v131 = vunpack.c.l.b16 %v77
    %v132 = vunpack.c.h.b16 %v77
    %v133 = vunpack.c.l.b16 %v78
    %v134 = vunpack.c.h.b16 %v78
    %v135 = vunpack.c.l.b16 %v79
    %v136 = vunpack.c.h.b16 %v79
    %v137 = vunpack.c.l.b16 %v80
    %v138 = vunpack.c.h.b16 %v80
    %v139 = vpack.c.b16 %v133, %v131
    %v140 = vpack.c.b16 %v134, %v132
    %v141 = vpack.c.b16 %v137, %v135
    %v142 = vpack.c.b16 %v138, %v136
    %vm147 = vcmask 261120
    %v149 = vsel %vm147, %v119, 0
    %v152 = vsel %vm147, %v120, 0
    %v155 = vsel %vm147, %v121, 0
    %v158 = vsel %vm147, %v122, 0
    %v161 = vsel %vm147, %v123, 0
    %v164 = vsel %vm147, %v124, 0
    %v167 = vsel %vm147, %v125, 0
    %v170 = vsel %vm147, %v126, 0
    %172 = vmatpush.bf16.msra.mxu0 0
    %173 = vmatpush.bf16.msra.mxu0 0
    %174 = vmatpush.bf16.msra.mxu0 0
    %175 = vmatpush.bf16.msra.mxu0 0
    %176 = vmatpush.bf16.msra.mxu0 0
    %177 = vmatpush.bf16.msra.mxu0 0
    %178 = vmatpush.bf16.msra.mxu0 %v141
    %179 = vmatpush.bf16.msra.mxu0 %v139
    %180 = vmatmul.bf16.gmra.mxu0 %v149
    %v181 = vpop.f32.mrf.mxu0
    %v182 = vadd.f32 %v83, %v181
    %v183 = vpop.f32.mrf.mxu0
    %v184 = vadd.f32 %v83, %v183
    %185 = vmatmul.bf16.gmra.mxu0 %v152
    %v186 = vpop.f32.mrf.mxu0
    %v187 = vadd.f32 %v83, %v186
    %v188 = vpop.f32.mrf.mxu0
    %v189 = vadd.f32 %v83, %v188
    %190 = vmatmul.bf16.gmra.mxu0 %v155
    %v191 = vpop.f32.mrf.mxu0
    %v192 = vadd.f32 %v83, %v191
    %v193 = vpop.f32.mrf.mxu0
    %v194 = vadd.f32 %v83, %v193
    %195 = vmatmul.bf16.gmra.mxu0 %v158
    %v196 = vpop.f32.mrf.mxu0
    %v197 = vadd.f32 %v83, %v196
    %v198 = vpop.f32.mrf.mxu0
    %v199 = vadd.f32 %v83, %v198
    %200 = vmatmul.bf16.gmra.mxu0 %v161
    %v201 = vpop.f32.mrf.mxu0
    %v202 = vadd.f32 %v83, %v201
    %v203 = vpop.f32.mrf.mxu0
    %v204 = vadd.f32 %v83, %v203
    %205 = vmatmul.bf16.gmra.mxu0 %v164
    %v206 = vpop.f32.mrf.mxu0
    %v207 = vadd.f32 %v83, %v206
    %v208 = vpop.f32.mrf.mxu0
    %v209 = vadd.f32 %v83, %v208
    %210 = vmatmul.bf16.gmra.mxu0 %v167
    %v211 = vpop.f32.mrf.mxu0
    %v212 = vadd.f32 %v83, %v211
    %v213 = vpop.f32.mrf.mxu0
    %v214 = vadd.f32 %v83, %v213
    %215 = vmatmul.bf16.gmra.mxu0 %v170
    %v216 = vpop.f32.mrf.mxu0
    %v217 = vadd.f32 %v83, %v216
    %v218 = vpop.f32.mrf.mxu0
    %v219 = vadd.f32 %v83, %v218
    %220 = vdwg.mxu0
    %221 = vmatpush.bf16.msra.mxu0 0
    %222 = vmatpush.bf16.msra.mxu0 0
    %223 = vmatpush.bf16.msra.mxu0 0
    %224 = vmatpush.bf16.msra.mxu0 0
    %225 = vmatpush.bf16.msra.mxu0 0
    %226 = vmatpush.bf16.msra.mxu0 0
    %227 = vmatpush.bf16.msra.mxu0 %v142
    %228 = vmatpush.bf16.msra.mxu0 %v140
    %229 = vmatmul.bf16.gmra.mxu0 %v149
    %v230 = vpop.f32.mrf.mxu0
    %v231 = vadd.f32 %v84, %v230
    %v232 = vpop.f32.mrf.mxu0
    %v233 = vadd.f32 %v84, %v232
    %234 = vmatmul.bf16.gmra.mxu0 %v152
    %v235 = vpop.f32.mrf.mxu0
    %v236 = vadd.f32 %v84, %v235
    %v237 = vpop.f32.mrf.mxu0
    %v238 = vadd.f32 %v84, %v237
    %239 = vmatmul.bf16.gmra.mxu0 %v155
    %v240 = vpop.f32.mrf.mxu0
    %v241 = vadd.f32 %v84, %v240
    %v242 = vpop.f32.mrf.mxu0
    %v243 = vadd.f32 %v84, %v242
    %244 = vmatmul.bf16.gmra.mxu0 %v158
    %v245 = vpop.f32.mrf.mxu0
    %v246 = vadd.f32 %v84, %v245
    %v247 = vpop.f32.mrf.mxu0
    %v248 = vadd.f32 %v84, %v247
    %249 = vmatmul.bf16.gmra.mxu0 %v161
    %v250 = vpop.f32.mrf.mxu0
    %v251 = vadd.f32 %v84, %v250
    %v252 = vpop.f32.mrf.mxu0
    %v253 = vadd.f32 %v84, %v252
    %254 = vmatmul.bf16.gmra.mxu0 %v164
    %v255 = vpop.f32.mrf.mxu0
    %v256 = vadd.f32 %v84, %v255
    %v257 = vpop.f32.mrf.mxu0
    %v258 = vadd.f32 %v84, %v257
    %259 = vmatmul.bf16.gmra.mxu0 %v167
    %v260 = vpop.f32.mrf.mxu0
    %v261 = vadd.f32 %v84, %v260
    %v262 = vpop.f32.mrf.mxu0
    %v263 = vadd.f32 %v84, %v262
    %264 = vmatmul.bf16.gmra.mxu0 %v170
    %v265 = vpop.f32.mrf.mxu0
    %v266 = vadd.f32 %v84, %v265
    %v267 = vpop.f32.mrf.mxu0
    %v268 = vadd.f32 %v84, %v267
    %269 = vdwg.mxu0
    %v270 = vmax.f32 %v231, %v241
    %v271 = vmax.f32 %v236, %v246
    %v272 = vmax.f32 %v270, %v251
    %v273 = vmax.f32 %v271, %v256
    %v274 = vmax.f32 %v272, %v261
    %v275 = vmax.f32 %v273, %v266
    %v276 = vmax.f32 %v274, %v275
    %v277 = vmax.f32 %v233, %v243
    %v278 = vmax.f32 %v238, %v248
    %v279 = vmax.f32 %v277, %v253
    %v280 = vmax.f32 %v278, %v258
    %v281 = vmax.f32 %v279, %v263
    %v282 = vmax.f32 %v280, %v268
    %v283 = vmax.f32 %v281, %v282
    %v284 = vsub.f32 %v231, %v276
    %v285 = vsub.f32 %v233, %v283
    %v286 = vsub.f32 %v236, %v276
    %v287 = vsub.f32 %v238, %v283
    %v288 = vsub.f32 %v241, %v276
    %v289 = vsub.f32 %v243, %v283
    %v290 = vsub.f32 %v246, %v276
    %v291 = vsub.f32 %v248, %v283
    %v292 = vsub.f32 %v251, %v276
    %v293 = vsub.f32 %v253, %v283
    %v294 = vsub.f32 %v256, %v276
    %v295 = vsub.f32 %v258, %v283
    %v296 = vsub.f32 %v261, %v276
    %v297 = vsub.f32 %v263, %v283
    %v298 = vsub.f32 %v266, %v276
    %v299 = vsub.f32 %v268, %v283
    %v300 = vmul.f32 %v284, 1.442695
    %v301 = vpow.pop %v300
    %v302 = vmul.f32 %v285, 1.442695
    %v303 = vpow.pop %v302
    %v304 = vmul.f32 %v286, 1.442695
    %v305 = vpow.pop %v304
    %v306 = vmul.f32 %v287, 1.442695
    %v307 = vpow.pop %v306
    %v308 = vmul.f32 %v288, 1.442695
    %v309 = vpow.pop %v308
    %v310 = vmul.f32 %v289, 1.442695
    %v311 = vpow.pop %v310
    %v312 = vmul.f32 %v290, 1.442695
    %v313 = vpow.pop %v312
    %v314 = vmul.f32 %v291, 1.442695
    %v315 = vpow.pop %v314
    %v316 = vmul.f32 %v292, 1.442695
    %v317 = vpow.pop %v316
    %v318 = vmul.f32 %v293, 1.442695
    %v319 = vpow.pop %v318
    %v320 = vmul.f32 %v294, 1.442695
    %v321 = vpow.pop %v320
    %v322 = vmul.f32 %v295, 1.442695
    %v323 = vpow.pop %v322
    %v324 = vmul.f32 %v296, 1.442695
    %v325 = vpow.pop %v324
    %v326 = vmul.f32 %v297, 1.442695
    %v327 = vpow.pop %v326
    %v328 = vmul.f32 %v298, 1.442695
    %v329 = vpow.pop %v328
    %v330 = vmul.f32 %v299, 1.442695
    %v331 = vpow.pop %v330
    %v332 = vadd.f32 %v301, %v305
    %v333 = vadd.f32 %v332, %v309
    %v334 = vadd.f32 %v333, %v313
    %v335 = vadd.f32 %v334, %v317
    %v336 = vadd.f32 %v335, %v321
    %v337 = vadd.f32 %v336, %v325
    %v338 = vadd.f32 %v337, %v329
    %v339 = vadd.f32 %v303, %v307
    %v340 = vadd.f32 %v339, %v311
    %v341 = vadd.f32 %v340, %v315
    %v342 = vadd.f32 %v341, %v319
    %v343 = vadd.f32 %v342, %v323
    %v344 = vadd.f32 %v343, %v327
    %v345 = vadd.f32 %v344, %v331
    %v346 = vrcp.pop %v338
    %v347 = vmul.f32 %v338, %v346
    %v348 = vsub.f32 1.0, %v347
    %v349 = vmul.f32 %v346, %v348
    %v350 = vadd.f32 %v346, %v349
    %vm351 = vweird.f32 %v338
    %vm352 = vweird.f32 %v346
    %vm353 = vmor %vm351, %vm352
    %v354 = vsel %vm353, %v346, %v350
    %v355 = vand.u32 2147483647, %v338
    %vm356 = vcmp.eq.f32.partialorder %v355, 8.507059e+37
    %v357 = vand.u32 %v338, 2147483648
    %v358 = vor.u32 1.1754944e-38, %v357
    %v359 = vsel %vm356, %v358, %v354
    %v360 = vmul.f32 %v301, %v359
    %v361 = vrcp.pop %v345
    %v362 = vmul.f32 %v345, %v361
    %v363 = vsub.f32 1.0, %v362
    %v364 = vmul.f32 %v361, %v363
    %v365 = vadd.f32 %v361, %v364
    %vm366 = vweird.f32 %v345
    %vm367 = vweird.f32 %v361
    %vm368 = vmor %vm366, %vm367
    %v369 = vsel %vm368, %v361, %v365
    %v370 = vand.u32 2147483647, %v345
    %vm371 = vcmp.eq.f32.partialorder %v370, 8.507059e+37
    %v372 = vand.u32 %v345, 2147483648
    %v373 = vor.u32 1.1754944e-38, %v372
    %v374 = vsel %vm371, %v373, %v369
    %v375 = vmul.f32 %v303, %v374
    %v376 = vmul.f32 %v305, %v359
    %v377 = vmul.f32 %v307, %v374
    %v378 = vmul.f32 %v309, %v359
    %v379 = vmul.f32 %v311, %v374
    %v380 = vmul.f32 %v313, %v359
    %v381 = vmul.f32 %v315, %v374
    %v382 = vmul.f32 %v317, %v359
    %v383 = vmul.f32 %v319, %v374
    %v384 = vmul.f32 %v321, %v359
    %v385 = vmul.f32 %v323, %v374
    %v386 = vmul.f32 %v325, %v359
    %v387 = vmul.f32 %v327, %v374
    %v388 = vmul.f32 %v329, %v359
    %v389 = vmul.f32 %v331, %v374
    %v390 = vmul.f32 %v360, %v182
    %v391 = vmul.f32 %v375, %v184
    %v392 = vmul.f32 %v376, %v187
    %v393 = vmul.f32 %v377, %v189
    %v394 = vmul.f32 %v378, %v192
    %v395 = vmul.f32 %v379, %v194
    %v396 = vmul.f32 %v380, %v197
    %v397 = vmul.f32 %v381, %v199
    %v398 = vmul.f32 %v382, %v202
    %v399 = vmul.f32 %v383, %v204
    %v400 = vmul.f32 %v384, %v207
    %v401 = vmul.f32 %v385, %v209
    %v402 = vmul.f32 %v386, %v212
    %v403 = vmul.f32 %v387, %v214
    %v404 = vmul.f32 %v388, %v217
    %v405 = vmul.f32 %v389, %v219
    %v406 = vadd.f32 %v390, %v392
    %v407 = vadd.f32 %v406, %v394
    %v408 = vadd.f32 %v407, %v396
    %v409 = vadd.f32 %v408, %v398
    %v410 = vadd.f32 %v409, %v400
    %v411 = vadd.f32 %v410, %v402
    %v412 = vadd.f32 %v411, %v404
    %v413 = vadd.f32 %v391, %v393
    %v414 = vadd.f32 %v413, %v395
    %v415 = vadd.f32 %v414, %v397
    %v416 = vadd.f32 %v415, %v399
    %v417 = vadd.f32 %v416, %v401
    %v418 = vadd.f32 %v417, %v403
    %v419 = vadd.f32 %v418, %v405
    %420 = vst [vmem:[#allocation8] sm:$0xff] %v412
    %421 = vst [vmem:[#allocation8 + $0x8] sm:$0xff] %v419
    // Predicated region
    $region26: #{tpu_custom_call.1} parent=1 // pred_check
      _
    $region27: #{tpu_custom_call.1} parent=1 // pred_check_branch
      %423 = sbr.rel (0) target = $region29
    $region28: #{tpu_custom_call.1} parent=1 // pred_region
      %425 = vsyncadd [#allocation4], 0
      %s426 = sshll.u32 [#allocation8], 4
      %s427 = int_to_ptr.vmem [resolvable:$true] %s426
      %s428 = sshll.u32 %s3, 4
      %s429 = int_to_ptr.hbm [resolvable:$true] %s428
      %434 = dma.vmem_to_hbm [thread:$0]  %s427, 256, %s429, [#allocation4], 128, 128, 8
    $region29: #{tpu_custom_call.1} parent=1 // pred_fallthru
      _
    // Predicated region
    $region30: #{tpu_custom_call.1} parent=1 // pred_check
      _
    $region31: #{tpu_custom_call.1} parent=1 // pred_check_branch
      %436 = sbr.rel (0) target = $region33
    $region32: #{tpu_custom_call.1} parent=1 // pred_region
      %438 = dma.done [#allocation4], 256
    $region33: #{tpu_custom_call.1} parent=1 // pred_fallthru
      _
    %439 = vsyncpa [#allocation3], 1
    %440 = vsyncpa [#allocation6], 1
    %441 = vsyncpa [#allocation4], 1

</llo_original>
